<compile_context>
chip_gen: v7x
topology: tpu7x:2x2x1
jax: 0.10.0
libtpu: 0.0.40
codegen_flags: <defaults>
</compile_context>

<pallas_src>
import functools

import jax
import jax.numpy as jnp
from jax import lax
from jax.experimental import pallas as pl
from jax.experimental.pallas import tpu as pltpu

EPS = 1e-5
LANE = 128
SUBLANE = 8
STATS_LANES = 128            # lane-aligned per-tile stats slab: col 0 = sum, col 1 = centered M2
TILE_S_MAX = 2048            # spatial tile width (lanes); blocks stay a few MiB on all gens
VMEM_LIMIT = 32 * 1024 * 1024


def _round_up(a, b):
    return (a + b - 1) // b * b


# ---------------------------------------------------------------------------
# Pass 1: y^T = W^T @ P^T on the MXU (bf16 in / f32 acc) -> per-tile BN partial
# stats only (per-channel sum and tile-centered sum of squares).
# ---------------------------------------------------------------------------
def _stats_kernel(p_ref, w_ref, stats_ref, *, s_valid, tile_s):
    j = pl.program_id(1)
    p = p_ref[0]                                                       # (Kp, tile_s) bf16 (ReLU'd)
    y = jnp.dot(w_ref[...], p, preferred_element_type=jnp.float32)     # (Cp, tile_s) f32

    rem = s_valid - j * tile_s                                         # valid columns in this tile
    valid = jnp.maximum(jnp.minimum(rem, tile_s), 1).astype(jnp.float32)
    lane = lax.broadcasted_iota(jnp.int32, y.shape, 1)
    mask = (lane < rem).astype(jnp.float32)

    # Padded spatial columns are exactly zero (relu(0)=0, zero weight cols) -> raw sum is exact.
    s = jnp.sum(y, axis=1, keepdims=True)                              # (Cp, 1)
    mean_t = s / valid
    d = (y - mean_t) * mask                                            # centered, padding masked
    m2 = jnp.sum(d * d, axis=1, keepdims=True)                         # (Cp, 1)

    col = lax.broadcasted_iota(jnp.int32, (y.shape[0], STATS_LANES), 1)
    stats_ref[0, 0] = jnp.where(col == 0, s, 0.0) + jnp.where(col == 1, m2, 0.0)


# ---------------------------------------------------------------------------
# Pass 2: recompute y^T (free: kernel is HBM-bound) and apply folded BN
#         o = y * scale + shift, written directly in (N, C, Ho*Wo) order.
# ---------------------------------------------------------------------------
def _apply_kernel(p_ref, w_ref, scale_ref, shift_ref, o_ref):
    y = jnp.dot(w_ref[...], p_ref[0], preferred_element_type=jnp.float32)  # (Cp, tile_s)
    o_ref[0] = y * scale_ref[...] + shift_ref[...]


def _stats_pass(patches, w, tile_s, s_valid):
    N, Kp, S_pad = patches.shape
    Cp = w.shape[0]
    T_s = S_pad // tile_s
    flops = 2 * N * S_pad * Kp * Cp
    bytes_accessed = patches.size * 2 + w.size * 2 + N * T_s * Cp * STATS_LANES * 4
    return pl.pallas_call(
        functools.partial(_stats_kernel, s_valid=s_valid, tile_s=tile_s),
        out_shape=jax.ShapeDtypeStruct((N, T_s, Cp, STATS_LANES), jnp.float32),
        grid_spec=pl.GridSpec(
            grid=(N, T_s),
            in_specs=[
                pl.BlockSpec((1, Kp, tile_s), lambda n, j: (n, 0, j)),
                pl.BlockSpec((Cp, Kp), lambda n, j: (0, 0)),
            ],
            out_specs=pl.BlockSpec((1, 1, Cp, STATS_LANES), lambda n, j: (n, j, 0, 0)),
        ),
        compiler_params=pltpu.CompilerParams(
            dimension_semantics=("parallel", "parallel"),
            vmem_limit_bytes=VMEM_LIMIT,
        ),
        cost_estimate=pl.CostEstimate(flops=flops, transcendentals=0,
                                      bytes_accessed=bytes_accessed),
    )(patches, w)


def _apply_pass(patches, w, scale, shift, tile_s):
    N, Kp, S_pad = patches.shape
    Cp = w.shape[0]
    T_s = S_pad // tile_s
    flops = 2 * N * S_pad * Kp * Cp
    bytes_accessed = patches.size * 2 + w.size * 2 + 2 * Cp * 4 + N * Cp * S_pad * 4
    return pl.pallas_call(
        _apply_kernel,
        out_shape=jax.ShapeDtypeStruct((N, Cp, S_pad), jnp.float32),
        grid_spec=pl.GridSpec(
            grid=(N, T_s),
            in_specs=[
                pl.BlockSpec((1, Kp, tile_s), lambda n, j: (n, 0, j)),
                pl.BlockSpec((Cp, Kp), lambda n, j: (0, 0)),
                pl.BlockSpec((Cp, 1), lambda n, j: (0, 0)),
                pl.BlockSpec((Cp, 1), lambda n, j: (0, 0)),
            ],
            out_specs=pl.BlockSpec((1, Cp, tile_s), lambda n, j: (n, 0, j)),
        ),
        compiler_params=pltpu.CompilerParams(
            dimension_semantics=("parallel", "parallel"),
            vmem_limit_bytes=VMEM_LIMIT,
        ),
        cost_estimate=pl.CostEstimate(flops=flops, transcendentals=0,
                                      bytes_accessed=bytes_accessed),
    )(patches, w, scale, shift)


def factorized_reduce(x, params, *, stride=2):
    """FactorizedReduce forward (affine=True, training-mode BatchNorm).

    x: (N, C_in, H, W) float32.
    params (stride==2): w0 (C_out//2, C_in, 1, 1), w1 (C_out - C_out//2, C_in, 1, 1)
    params (stride==1): w  (C_out, C_in, 1, 1)
    plus gamma, beta of shape (C_out,).
    """
    N, C_in, H, W = x.shape
    gamma = params["gamma"].astype(jnp.float32)
    beta = params["beta"].astype(jnp.float32)
    C_out = gamma.shape[0]

    if stride == 2:
        Ho, Wo = -(-H // 2), -(-W // 2)
        # ReLU + bf16 cast BEFORE the gather so XLA emits a single bf16 gather fusion.
        xr = jnp.maximum(x, 0.0).astype(jnp.bfloat16)
        a = xr[:, :, ::2, ::2].reshape(N, C_in, Ho * Wo)                    # pixels (0,0) of 2x2
        xs = jnp.pad(xr, ((0, 0), (0, 0), (0, 1), (0, 1)))[:, :, 1:, 1:]    # ConstantPad2d + [1:,1:]
        b = xs[:, :, ::2, ::2].reshape(N, C_in, Ho * Wo)                    # pixels (1,1) of 2x2
        patches = jnp.concatenate([a, b], axis=1)                           # (N, 2*C_in, Ho*Wo)
        K = 2 * C_in
        C1 = C_out // 2
        w0 = params["w0"].reshape(C1, C_in).astype(jnp.float32)
        w1 = params["w1"].reshape(C_out - C1, C_in).astype(jnp.float32)
        w_t = jnp.zeros((C_out, K), jnp.float32)                            # block-diagonal W^T
        w_t = w_t.at[:C1, :C_in].set(w0)                                    # => fused concat
        w_t = w_t.at[C1:, C_in:].set(w1)
    elif stride == 1:
        Ho, Wo = H, W
        patches = x.astype(jnp.bfloat16).reshape(N, C_in, H * W)            # stride=1 path: no ReLU
        K = C_in
        w_t = params["w"].reshape(C_out, C_in).astype(jnp.float32)
    else:
        raise ValueError(f"Invalid stride: {stride}")

    S = Ho * Wo
    M = N * S
    Kp = _round_up(K, SUBLANE)            # contraction dim on sublanes: pad only to 8, not 128
    Cp = _round_up(C_out, SUBLANE)        # channel dim on sublanes: pad only to 8, not 128
    S1 = _round_up(S, LANE)               # spatial axis owns the 128 lanes
    tile_s = min(S1, TILE_S_MAX)
    T_s = -(-S1 // tile_s)
    S_pad = T_s * tile_s

    # Single pad covering both the K and spatial padding (padded entries are exact zeros).
    patches_p = jnp.pad(patches, ((0, 0), (0, Kp - K), (0, S_pad - S)))
    w_p = jnp.pad(w_t, ((0, Cp - C_out), (0, Kp - K))).astype(jnp.bfloat16)

    # Pass 1: tiny per-tile partial stats (no pre-BN intermediate written to HBM).
    stats = _stats_pass(patches_p, w_p, tile_s, S)            # (N, T_s, Cp, STATS_LANES)
    s_t = stats[..., 0]                                       # per-tile channel sums
    m2_t = stats[..., 1]                                      # per-tile centered sum of squares

    # Parallel-variance combination (numerically stable vs E[y^2]-E[y]^2).
    starts = jnp.arange(T_s) * tile_s
    n_t = jnp.clip(S - starts, 1, tile_s).astype(jnp.float32)        # valid count per spatial tile
    mean = jnp.sum(s_t, axis=(0, 1)) / M                             # (Cp,)
    mean_t = s_t / n_t[None, :, None]
    var = (jnp.sum(m2_t, axis=(0, 1))
           + jnp.sum(n_t[None, :, None] * (mean_t - mean[None, None, :]) ** 2, axis=(0, 1))) / M
    var = jnp.maximum(var, 0.0)
    inv_std = lax.rsqrt(var + EPS)

    gamma_p = jnp.pad(gamma, (0, Cp - C_out))                 # padded channels: gamma=beta=0 -> 0
    beta_p = jnp.pad(beta, (0, Cp - C_out))
    scale = (gamma_p * inv_std).reshape(Cp, 1).astype(jnp.float32)
    shift = (beta_p - mean * gamma_p * inv_std).reshape(Cp, 1).astype(jnp.float32)

    # Pass 2: recompute matmul + folded BN epilogue, output already channel-major (NCHW-flat).
    out = _apply_pass(patches_p, w_p, scale, shift, tile_s)   # (N, Cp, S_pad) f32

    return out[:, :C_out, :S].reshape(N, C_out, Ho, Wo)       # no transpose needed


def reference(x, params, *, stride=2):
    gamma, beta = params["gamma"], params["beta"]
    if stride == 2:
        xr = jnp.maximum(x, 0.0)
        b0 = lax.conv_general_dilated(xr, params["w0"], (2, 2), "VALID",
                                      dimension_numbers=("NCHW", "OIHW", "NCHW"))
        y = jnp.pad(xr, ((0, 0), (0, 0), (0, 1), (0, 1)))[:, :, 1:, 1:]
        b1 = lax.conv_general_dilated(y, params["w1"], (2, 2), "VALID",
                                      dimension_numbers=("NCHW", "OIHW", "NCHW"))
        out = jnp.concatenate([b0, b1], axis=1)
    else:
        out = lax.conv_general_dilated(x, params["w"], (1, 1), "VALID",
                                       dimension_numbers=("NCHW", "OIHW", "NCHW"))
    mean = out.mean(axis=(0, 2, 3), keepdims=True)
    var = ((out - mean) ** 2).mean(axis=(0, 2, 3), keepdims=True)
    out_hat = (out - mean) * lax.rsqrt(var + EPS)
    return out_hat * gamma.reshape(1, -1, 1, 1) + beta.reshape(1, -1, 1, 1)


if __name__ == "__main__":
    # FactorizedReduce(C_in=4, C_out=8, stride=2, affine=True, track_running_stats=True)
    N, C_in, H, W = 2, 4, 16, 16
    C_out, stride = 8, 2
    C1 = C_out // 2

    key = jax.random.PRNGKey(0)
    kx, k0, k1, kg, kb = jax.random.split(key, 5)
    x = jax.random.normal(kx, (N, C_in, H, W), dtype=jnp.float32)
    w0 = 0.3 * jax.random.normal(k0, (C1, C_in, 1, 1), dtype=jnp.float32)
    w1 = 0.3 * jax.random.normal(k1, (C_out - C1, C_in, 1, 1), dtype=jnp.float32)
    gamma = 1.0 + 0.1 * jax.random.normal(kg, (C_out,), dtype=jnp.float32)
    beta = 0.1 * jax.random.normal(kb, (C_out,), dtype=jnp.float32)
    params = {"w0": w0, "w1": w1, "gamma": gamma, "beta": beta}

    out = factorized_reduce(x, params, stride=stride)
    out = jax.block_until_ready(out)

    ref = reference(x, params, stride=stride)
    assert out.shape == (N, C_out, H // 2, W // 2), out.shape
    # bf16 MXU inputs with f32 accumulation => compare at a bf16-appropriate tolerance.
    max_err = float(jnp.max(jnp.abs(out - ref)))
    assert jnp.allclose(out, ref, atol=5e-2, rtol=5e-2), max_err
    print("KERNEL_OK")
</pallas_src>

<mosaic_0001>
module attributes {stable_mosaic.version = 11 : i64} {
  func.func @_stats_kernel(%arg0: i32, %arg1: i32, %arg2: memref<1x8x128xbf16, #tpu.memory_space<vmem>>, %arg3: memref<8x8xbf16, #tpu.memory_space<vmem>>, %arg4: memref<1x1x8x128xf32, #tpu.memory_space<vmem>>) attributes {dimension_semantics = [#tpu.dimension_semantics<parallel>, #tpu.dimension_semantics<parallel>], iteration_bounds = array<i64: 2, 1>, scalar_prefetch = 0 : i64, scratch_operands = 0 : i64, tpu.core_type = #tpu.core_type<tc>, window_params = [{transform_indices = @transform_0, window_bounds = array<i64: 1, 8, 128>}, {pipeline_mode = #tpu.pipeline_mode<synchronous>, transform_indices = @transform_1, window_bounds = array<i64: 8, 8>}, {transform_indices = @transform_2, window_bounds = array<i64: 1, 1, 8, 128>}]} {
    %c0 = arith.constant 0 : index
    %c0_0 = arith.constant 0 : index
    %c0_1 = arith.constant 0 : index
    %0 = vector.load %arg2[%c0, %c0_0, %c0_1] : memref<1x8x128xbf16, #tpu.memory_space<vmem>>, vector<1x8x128xbf16>
    %1 = vector.shape_cast %0 : vector<1x8x128xbf16> to vector<8x128xbf16>
    %c0_2 = arith.constant 0 : index
    %c0_3 = arith.constant 0 : index
    %2 = vector.load %arg3[%c0_2, %c0_3] : memref<8x8xbf16, #tpu.memory_space<vmem>>, vector<8x8xbf16>
    %cst = arith.constant dense<0.000000e+00> : vector<8x128xf32>
    %3 = tpu.matmul %2, %1, %cst {dimension_numbers = #tpu.dot_dimension_numbers<[1], [0], [0], [1], [0, 0, 1, 1], [], []>} : vector<8x8xbf16>, vector<8x128xbf16>, vector<8x128xf32> -> vector<8x128xf32>
    %c128_i32 = arith.constant 128 : i32
    %4 = arith.muli %arg1, %c128_i32 : i32
    %c64_i32 = arith.constant 64 : i32
    %5 = arith.subi %c64_i32, %4 : i32
    %c128_i32_4 = arith.constant 128 : i32
    %6 = arith.minsi %5, %c128_i32_4 : i32
    %c1_i32 = arith.constant 1 : i32
    %7 = arith.maxsi %6, %c1_i32 : i32
    %8 = arith.sitofp %7 : i32 to f32
    %9 = tpu.iota {dimensions = array<i32: 1>} : vector<8x128xi32>
    %10 = vector.broadcast %5 : i32 to vector<8x128xi32>
    %11 = arith.cmpi slt, %9, %10 : vector<8x128xi32>
    %12 = arith.extui %11 : vector<8x128xi1> to vector<8x128xi32>
    %13 = arith.sitofp %12 : vector<8x128xi32> to vector<8x128xf32>
    %cst_5 = arith.constant dense<0.000000e+00> : vector<8xf32>
    %14 = vector.multi_reduction <add>, %3, %cst_5 [1] : vector<8x128xf32> to vector<8xf32>
    %15 = vector.shape_cast %14 : vector<8xf32> to vector<8x1xf32>
    %16 = vector.broadcast %8 : f32 to vector<8x1xf32>
    %17 = arith.divf %15, %16 : vector<8x1xf32>
    %18 = vector.broadcast %17 : vector<8x1xf32> to vector<8x128xf32>
    %19 = arith.subf %3, %18 : vector<8x128xf32>
    %20 = arith.mulf %19, %13 : vector<8x128xf32>
    %21 = arith.mulf %20, %20 : vector<8x128xf32>
    %cst_6 = arith.constant dense<0.000000e+00> : vector<8xf32>
    %22 = vector.multi_reduction <add>, %21, %cst_6 [1] : vector<8x128xf32> to vector<8xf32>
    %23 = vector.shape_cast %22 : vector<8xf32> to vector<8x1xf32>
    %24 = tpu.iota {dimensions = array<i32: 1>} : vector<8x128xi32>
    %c0_i32 = arith.constant 0 : i32
    %25 = vector.broadcast %c0_i32 : i32 to vector<8x128xi32>
    %26 = arith.cmpi eq, %24, %25 : vector<8x128xi32>
    %cst_7 = arith.constant 0.000000e+00 : f32
    %27 = vector.shape_cast %15 : vector<8x1xf32> to vector<8x1xf32>
    %28 = vector.broadcast %27 : vector<8x1xf32> to vector<8x128xf32>
    %29 = vector.broadcast %cst_7 : f32 to vector<8x128xf32>
    %30 = arith.select %26, %28, %29 : vector<8x128xi1>, vector<8x128xf32>
    %c1_i32_8 = arith.constant 1 : i32
    %31 = vector.broadcast %c1_i32_8 : i32 to vector<8x128xi32>
    %32 = arith.cmpi eq, %24, %31 : vector<8x128xi32>
    %cst_9 = arith.constant 0.000000e+00 : f32
    %33 = vector.shape_cast %23 : vector<8x1xf32> to vector<8x1xf32>
    %34 = vector.broadcast %33 : vector<8x1xf32> to vector<8x128xf32>
    %35 = vector.broadcast %cst_9 : f32 to vector<8x128xf32>
    %36 = arith.select %32, %34, %35 : vector<8x128xi1>, vector<8x128xf32>
    %37 = arith.addf %30, %36 : vector<8x128xf32>
    %c0_10 = arith.constant 0 : index
    %c0_11 = arith.constant 0 : index
    %c0_12 = arith.constant 0 : index
    %c0_13 = arith.constant 0 : index
    %38 = vector.load %arg4[%c0_10, %c0_11, %c0_12, %c0_13] : memref<1x1x8x128xf32, #tpu.memory_space<vmem>>, vector<1x1x8x128xf32>
    %39 = vector.shape_cast %38 : vector<1x1x8x128xf32> to vector<8x128xf32>
    %40 = vector.shape_cast %37 : vector<8x128xf32> to vector<1x1x8x128xf32>
    tpu.vector_store %arg4[%c0_10, %c0_11, %c0_12, %c0_13], %40 {strides = array<i32>} : memref<1x1x8x128xf32, #tpu.memory_space<vmem>>, vector<1x1x8x128xf32>,
    return
  }
  func.func @transform_0(%arg0: i32, %arg1: i32) -> (i32, i32, i32) {
    %c0_i32 = arith.constant 0 : i32
    %c0_i32_0 = arith.constant 0 : i32
    return %arg0, %c0_i32, %arg1 : i32, i32, i32
  }
  func.func @transform_1(%arg0: i32, %arg1: i32) -> (i32, i32) {
    %c0_i32 = arith.constant 0 : i32
    %c0_i32_0 = arith.constant 0 : i32
    %c0_i32_1 = arith.constant 0 : i32
    return %c0_i32, %c0_i32_0 : i32, i32
  }
  func.func @transform_2(%arg0: i32, %arg1: i32) -> (i32, i32, i32, i32) {
    %c0_i32 = arith.constant 0 : i32
    %c0_i32_0 = arith.constant 0 : i32
    %c0_i32_1 = arith.constant 0 : i32
    return %arg0, %arg1, %c0_i32, %c0_i32_0 : i32, i32, i32, i32
  }
}

</mosaic_0001>

<llo_original>
// kernel: tpu_custom_call.1
$region0: #{tpu_custom_call.1}
  #allocation0 [shape = 'u32[]', space=smem, size = 0x4, offset = 0x4, fixed_abs, tag = 'smem constant byte address 0x4 - core index']
  #allocation1 [shape = 'u32[144,128]{1,0:T(1,128)}', space=vmem, size = 0x12000, scoped, tag = 'internal scratch']
  %s0 = inlined_call_operand.hbm [shape: bf16[2,8,128], index: 0, kind: input, shape index: {}]
  %s1 = inlined_call_operand.hbm [shape: bf16[8,8], index: 1, kind: input, shape index: {}]
  %s2 = inlined_call_operand.hbm [shape: f32[2,1,8,128], index: 2, kind: output, shape index: {}]
  %s3 = sld [smem:[#allocation0]]
  $region49: #{tpu_custom_call.1} parent=0
    _
  %s5 = ssub.s32 1, %s3
  %s6 = scalar_select 0, %s5, %s3
  $region1: #{tpu_custom_call.1} parent=0
    #allocation2 [shape = 'u8[4096]{0}', space=vmem, size = 0x1000, scoped, tag = 'input window, operand 0']
    #allocation3 [shape = 's32[2]{0}', space=sflag, size = 0x8, scoped, tag = 'scoped memory for tpu_custom_call.1']
    #allocation4 [shape = 's32[2]{0}', space=sflag, size = 0x8, scoped, tag = 'scoped memory for tpu_custom_call.1']
    #allocation5 [shape = 'u8[2048]{0}', space=vmem, size = 0x800, scoped, tag = 'input window, operand 1, single buffered']
    #allocation6 [shape = 's32[1]{0}', space=sflag, size = 0x4, scoped, tag = 'scoped memory for tpu_custom_call.1']
    #allocation7 [shape = 'u8[8192]{0}', space=vmem, size = 0x2000, scoped, tag = 'output window, operand 0']
    %7 = vsyncpa [#allocation3], 0
    %s8 = scalar_lea.sflag [#allocation3], 1
    %9 = vsyncpa %s8, 0
    %10 = vsyncpa [#allocation6], 0
    %11 = vsyncpa [#allocation4], 0
    %s12 = scalar_lea.sflag [#allocation4], 1
    %13 = vsyncpa %s12, 0
    loop: start=0, step=1, limit=4
    $region2: #{tpu_custom_call.1} parent=1 // loop_pre_header
      _
    $region3: #{tpu_custom_call.1} parent=1 // loop_header
      %s15 = sphi 0, %s19
      %p16 = scmp.ge.s32.totalorder %s15, 4
      %s22 = sphi 0, %s34
      %s23 = sphi 0, %s30
      %s24 = sphi 0, %s22
      %s25 = sphi 0, %s23
      %s26 = sphi 0, %s24
      %s27 = sphi 0, %s25
      %s39 = sphi 0, %s41
      %s42 = sphi 0, %s39
      %s43 = sphi 0, %s42
      %s59 = sphi 0, %s43
      %s63 = sphi 0, %s63
      %s65 = sphi 0, %s63
      %s66 = sphi 0, %s65
      %s80 = sphi 0, %s66
      %s88 = sphi 0, %s90
      %s91 = sphi 0, %s88
      %s92 = sphi 0, %s91
      %s108 = sphi 0, %s92
    $region4: #{tpu_custom_call.1} parent=1 // loop_header_branch
      %18 = sbr.rel (%p16) target = $region8
    $region5: #{tpu_custom_call.1} parent=1 // loop_body
      %s20 = ssub.s32 %s15, 1
      %s21 = ssub.s32 %s15, 2
      %s28 = sadd.s32 1, %s23
      %p29 = scmp.ge.s32.totalorder %s28, 1
      %s30 = scalar_select %p29, 0, %s28
      %s31 = sadd.s32 1, %s22
      %s32 = scalar_select %p29, %s31, %s22
      %p33 = scmp.ge.s32.totalorder %s32, 2
      %s34 = scalar_select %p33, 0, %s32
      %s35 = ssub.s32 %s22, %s34
      %s36 = ssub.s32 %s23, %s30
      %s37 = sor.u32 %s35, %s36
      %p38 = scmp.eq.s32.totalorder %s37, 0
      %s40 = sadd.s32 %s39, 1
      %s41 = scalar_select %p38, %s39, %s40
      %p44 = pneg %p38
      %p45 = scmp.eq.s32.totalorder %s15, 1
      %p46 = por %p44, %p45
      %p47 = scmp.ne.s32.totalorder %s39, %s42
      %p48 = scmp.eq.s32.totalorder %s15, 0
      %p49 = por %p47, %p48
      %p50 = scmp.ne.s32.totalorder %s39, %s42
      %p51 = scmp.eq.s32.totalorder %s20, 1
      %p52 = por %p50, %p51
      %p53 = scmp.ne.s32.totalorder %s42, %s43
      %p54 = scmp.eq.s32.totalorder %s20, 0
      %p55 = por %p53, %p54
      %p56 = scmp.ne.s32.totalorder %s42, %s43
      %p57 = scmp.eq.s32.totalorder %s21, 1
      %p58 = por %p56, %p57
      %p60 = scmp.ne.s32.totalorder %s43, %s59
      %p61 = scmp.eq.s32.totalorder %s21, 0
      %p62 = por %p60, %p61
      %s64 = sadd.s32 %s63, 1
      %p67 = scmp.eq.s32.totalorder %s15, 1
      %p68 = scmp.ne.s32.totalorder %s63, %s65
      %p69 = scmp.eq.s32.totalorder %s15, 0
      %p70 = por %p68, %p69
      %p71 = scmp.ne.s32.totalorder %s63, %s65
      %p72 = scmp.eq.s32.totalorder %s20, 1
      %p73 = por %p71, %p72
      %p74 = scmp.ne.s32.totalorder %s65, %s66
      %p75 = scmp.eq.s32.totalorder %s20, 0
      %p76 = por %p74, %p75
      %p77 = scmp.ne.s32.totalorder %s65, %s66
      %p78 = scmp.eq.s32.totalorder %s21, 1
      %p79 = por %p77, %p78
      %p81 = scmp.ne.s32.totalorder %s66, %s80
      %p82 = scmp.eq.s32.totalorder %s21, 0
      %p83 = por %p81, %p82
      %s84 = ssub.s32 %s22, %s34
      %s85 = ssub.s32 %s23, %s30
      %s86 = sor.u32 %s84, %s85
      %p87 = scmp.eq.s32.totalorder %s86, 0
      %s89 = sadd.s32 %s88, 1
      %s90 = scalar_select %p87, %s88, %s89
      %p93 = pneg %p87
      %p94 = scmp.eq.s32.totalorder %s15, 1
      %p95 = por %p93, %p94
      %p96 = scmp.ne.s32.totalorder %s88, %s91
      %p97 = scmp.eq.s32.totalorder %s15, 0
      %p98 = por %p96, %p97
      %p99 = scmp.ne.s32.totalorder %s88, %s91
      %p100 = scmp.eq.s32.totalorder %s20, 1
      %p101 = por %p99, %p100
      %p102 = scmp.ne.s32.totalorder %s91, %s92
      %p103 = scmp.eq.s32.totalorder %s20, 0
      %p104 = por %p102, %p103
      %p105 = scmp.ne.s32.totalorder %s91, %s92
      %p106 = scmp.eq.s32.totalorder %s21, 1
      %p107 = por %p105, %p106
      %p109 = scmp.ne.s32.totalorder %s92, %s108
      %p110 = scmp.eq.s32.totalorder %s21, 0
      %p111 = por %p109, %p110
      %p112 = scmp.le.s32.totalorder 1, %s15
      %p113 = scmp.lt.s32.totalorder %s15, 3
      %p114 = pnand %p112, %p113
      %p115 = pneg %p114
      // Predicated region
      $region9: #{tpu_custom_call.1} parent=5 // pred_check
        _
      $region10: #{tpu_custom_call.1} parent=5 // pred_check_branch
        %117 = sbr.rel (%p114) target = $region12
      $region11: #{tpu_custom_call.1} parent=5 // pred_region
        %s118 = ssub.s32 %s15, 1
        // Predicated region
        $region13: #{tpu_custom_call.1} parent=11 // pred_check
          %p119 = pneg %p76
        $region14: #{tpu_custom_call.1} parent=11 // pred_check_branch
          %121 = sbr.rel (%p119) target = $region16
        $region15: #{tpu_custom_call.1} parent=11 // pred_region
          %s123 = ssub.s32 64, 64
          %124 = vsyncadd [#allocation6], %s123
          %s126 = sshll.u32 [#allocation5], 4
          %s127 = int_to_ptr.vmem [resolvable:$true] %s126
          %129 = dma.hbm_to_vmem [thread:$0]  %s1, 64, %s127, [#allocation6]
        $region16: #{tpu_custom_call.1} parent=11 // pred_fallthru
          _
      $region12: #{tpu_custom_call.1} parent=5 // pred_fallthru
        _
      %p130 = scmp.lt.s32.totalorder %s15, 2
      // Predicated region
      $region17: #{tpu_custom_call.1} parent=5 // pred_check
        %p131 = pneg %p130
      $region18: #{tpu_custom_call.1} parent=5 // pred_check_branch
        %133 = sbr.rel (%p131) target = $region20
      $region19: #{tpu_custom_call.1} parent=5 // pred_region
        // Predicated region
        $region21: #{tpu_custom_call.1} parent=19 // pred_check
          %p134 = pneg %p49
        $region22: #{tpu_custom_call.1} parent=19 // pred_check_branch
          %136 = sbr.rel (%p134) target = $region24
        $region23: #{tpu_custom_call.1} parent=19 // pred_region
          %s137 = sand.u32 %s39, 1
          %s138 = scalar_lea.sflag [#allocation3], %s137
          %s139 = sand.u32 %s39, 1
          %s140 = smul.addr %s139, 4
          %s141 = scalar_lea.vmem [#allocation2], %s140
          %s143 = ssub.s32 64, 64
          %144 = vsyncadd %s138, %s143
          %s145 = sadd.s32 %s23, %s22
          %s146 = smul.addr %s145, 64
          %s147 = scalar_lea.hbm %s0, %s146
          %s149 = sshll.u32 %s141, 4
          %s150 = int_to_ptr.vmem [resolvable:$true] %s149
          %152 = dma.hbm_to_vmem [thread:$0]  %s147, 64, %s150, %s138
        $region24: #{tpu_custom_call.1} parent=19 // pred_fallthru
          _
      $region20: #{tpu_custom_call.1} parent=5 // pred_fallthru
        _
      %p153 = scmp.le.s32.totalorder 1, %s15
      %p154 = scmp.lt.s32.totalorder %s15, 3
      %p155 = pnand %p153, %p154
      %p156 = pneg %p155
      // Predicated region
      $region25: #{tpu_custom_call.1} parent=5 // pred_check
        _
      $region26: #{tpu_custom_call.1} parent=5 // pred_check_branch
        %158 = sbr.rel (%p155) target = $region28
      $region27: #{tpu_custom_call.1} parent=5 // pred_region
        %s159 = ssub.s32 %s15, 1
        %s160 = sand.u32 %s42, 1
        %s161 = scalar_lea.sflag [#allocation3], %s160
        %s162 = sand.u32 %s42, 1
        %s163 = smul.addr %s162, 4
        %s164 = scalar_lea.vmem [#allocation2], %s163
        // Predicated region
        $region29: #{tpu_custom_call.1} parent=27 // pred_check
          %p165 = pneg %p55
        $region30: #{tpu_custom_call.1} parent=27 // pred_check_branch
          %167 = sbr.rel (%p165) target = $region32
        $region31: #{tpu_custom_call.1} parent=27 // pred_region
          %168 = dma.done %s161, 64
        $region32: #{tpu_custom_call.1} parent=27 // pred_fallthru
          _
        // Predicated region
        $region33: #{tpu_custom_call.1} parent=27 // pred_check
          %p169 = pneg %p76
        $region34: #{tpu_custom_call.1} parent=27 // pred_check_branch
          %171 = sbr.rel (%p169) target = $region36
        $region35: #{tpu_custom_call.1} parent=27 // pred_region
          %172 = dma.done [#allocation6], 64
        $region36: #{tpu_custom_call.1} parent=27 // pred_fallthru
          _
        %s173 = sand.u32 %s42, 1
        %s174 = scalar_lea.sflag [#allocation3], %s173
        %s175 = sand.u32 %s42, 1
        %s176 = smul.addr %s175, 4
        %s177 = scalar_lea.vmem [#allocation2], %s176
        %p178 = pneg %p55
        %p179 = pneg %p52
        %p180 = pneg %p76
        %p181 = pneg %p73
        %p182 = pneg %p104
        %p183 = pneg %p101
        %s184 = sand.u32 %s91, 1
        %s185 = scalar_lea.sflag [#allocation4], %s184
        %s186 = sand.u32 %s91, 1
        %s187 = smul.addr %s186, 8
        %s188 = scalar_lea.vmem [#allocation7], %s187
        %v190 = vld [vmem:[%s164] sm:$0xf]
        %v191 = vld [vmem:[#allocation5] sm:$0xf]
        %vm192 = vcmask 64512
        %v194 = vsel %vm192, %v191, 0
        %vm196 = vcmask 1043456
        %v198 = vsel %vm196, %v190, 0
        %200 = vmatprep.subr.bf16.mxu0 0
        %201 = vmatpush1.bf16.msra.mxu0 %v198
        %202 = vmatprep.subr.bf16.mxu0 0
        %203 = vmatpush1.bf16.msra.mxu0 0
        %204 = vmatprep.subr.bf16.mxu0 0
        %205 = vmatpush1.bf16.msra.mxu0 0
        %206 = vmatprep.subr.bf16.mxu0 0
        %207 = vmatpush1.bf16.msra.mxu0 0
        %208 = vmatprep.subr.bf16.mxu0 0
        %209 = vmatpush1.bf16.msra.mxu0 0
        %210 = vmatprep.subr.bf16.mxu0 0
        %211 = vmatpush1.bf16.msra.mxu0 0
        %212 = vmatprep.subr.bf16.mxu0 0
        %213 = vmatpush1.bf16.msra.mxu0 0
        %214 = vmatprep.subr.bf16.mxu0 0
        %215 = vmatpush1.bf16.msra.mxu0 0
        %216 = vmatprep.subr.bf16.mxu0 0
        %217 = vmatpush1.bf16.msra.mxu0 0
        %218 = vmatprep.subr.bf16.mxu0 0
        %219 = vmatpush1.bf16.msra.mxu0 0
        %220 = vmatprep.subr.bf16.mxu0 0
        %221 = vmatpush1.bf16.msra.mxu0 0
        %222 = vmatprep.subr.bf16.mxu0 0
        %223 = vmatpush1.bf16.msra.mxu0 0
        %224 = vmatprep.subr.bf16.mxu0 0
        %225 = vmatpush1.bf16.msra.mxu0 0
        %226 = vmatprep.subr.bf16.mxu0 0
        %227 = vmatpush1.bf16.msra.mxu0 0
        %228 = vmatprep.subr.bf16.mxu0 0
        %229 = vmatpush1.bf16.msra.mxu0 0
        %230 = vmatprep.subr.bf16.mxu0 0
        %231 = vmatpush1.bf16.msra.mxu0 0
        %232 = vmatprep.mubr.bf16.mxu0 0
        %233 = vmatmul.mubr.bf16.gmra.mrb[0].mxu0 %v194
        %v234 = vpop.f32.mrb[0].mxu0
        %v235 = vadd.f32 0.0, %v234
        %v236 = vpop.f32.mrb[0].mxu0
        %v237 = vpop.f32.mrb[0].mxu0
        %v238 = vpop.f32.mrb[0].mxu0
        %239 = vdwg.mxu0
        %s240 = smul.u32 %s25, 128
        %s241 = ssub.s32 64, %s240
        %p242 = scmp.lt.s32.totalorder %s241, 128
        %s243 = scalar_select %p242, %s241, 128
        %p244 = scmp.gt.s32.totalorder %s243, 1
        %s245 = scalar_select %p244, %s243, 1
        %s246 = scvt.s32.f32 %s245
        %v247 = vlaneseq
        %v248 = vand.u32 %v247, 127
        %v249 = vstv %s241
        %vm250 = vcmp.lt.s32.totalorder %v248, %v249
        %v251 = vsel %vm250, 1, 0
        %v252 = vcvt.s32.f32 %v251
        %253 = vadd.xlane.f32.xlu0 %v235
        %v254 = vpop.xlane.xlu0 %253
        %v255 = vstv %s246
        %v256 = vrcp.pop %v255
        %v257 = vmul.f32 %v254, %v256
        %v258 = vsub.f32 %v235, %v257
        %v259 = vmul.f32 %v258, %v252
        %v260 = vmul.f32 %v259, %v259
        %261 = vadd.xlane.f32.xlu0 %v260
        %v262 = vpop.xlane.xlu0 %261
        %vm263 = vcmp.eq.s32.totalorder %v248, 0
        %v264 = vsel %vm263, %v254, 0.0
        %vm265 = vcmp.eq.s32.totalorder %v248, 1
        %v266 = vsel %vm265, %v262, 0.0
        %v267 = vadd.f32 %v264, %v266
        %268 = vst [vmem:[%s188] sm:$0xff] %v267
        %s269 = sand.u32 %s91, 1
        %s270 = scalar_lea.sflag [#allocation4], %s269
        %s271 = sand.u32 %s91, 1
        %s272 = smul.addr %s271, 8
        %s273 = scalar_lea.vmem [#allocation7], %s272
        // Predicated region
        $region37: #{tpu_custom_call.1} parent=27 // pred_check
          %p274 = pneg %p101
        $region38: #{tpu_custom_call.1} parent=27 // pred_check_branch
          %276 = sbr.rel (%p274) target = $region40
        $region39: #{tpu_custom_call.1} parent=27 // pred_region
          %s278 = ssub.s32 128, 128
          %279 = vsyncadd %s270, %s278
          %s280 = sadd.s32 %s25, %s24
          %s281 = smul.addr %s280, 128
          %s282 = scalar_lea.hbm %s2, %s281
          %s284 = sshll.u32 %s273, 4
          %s285 = int_to_ptr.vmem [resolvable:$true] %s284
          %287 = dma.vmem_to_hbm [thread:$0]  %s285, 128, %s282, %s270
        $region40: #{tpu_custom_call.1} parent=27 // pred_fallthru
          _
      $region28: #{tpu_custom_call.1} parent=5 // pred_fallthru
        _
      %p288 = scmp.le.s32.totalorder 2, %s15
      // Predicated region
      $region41: #{tpu_custom_call.1} parent=5 // pred_check
        %p289 = pneg %p288
      $region42: #{tpu_custom_call.1} parent=5 // pred_check_branch
        %291 = sbr.rel (%p289) target = $region44
      $region43: #{tpu_custom_call.1} parent=5 // pred_region
        %s292 = ssub.s32 %s15, 2
        // Predicated region
        $region45: #{tpu_custom_call.1} parent=43 // pred_check
          %p293 = pneg %p107
        $region46: #{tpu_custom_call.1} parent=43 // pred_check_branch
          %295 = sbr.rel (%p293) target = $region48
        $region47: #{tpu_custom_call.1} parent=43 // pred_region
          %s296 = sand.u32 %s92, 1
          %s297 = scalar_lea.sflag [#allocation4], %s296
          %s298 = sand.u32 %s92, 1
          %s299 = smul.addr %s298, 8
          %s300 = scalar_lea.vmem [#allocation7], %s299
          %301 = dma.done %s297, 128
        $region48: #{tpu_custom_call.1} parent=43 // pred_fallthru
          _
      $region44: #{tpu_custom_call.1} parent=5 // pred_fallthru
        _
    $region6: #{tpu_custom_call.1} parent=1 // loop_footer
      %s19 = sadd.s32 1, %s15
    $region7: #{tpu_custom_call.1} parent=1 // loop_footer_branch
      %14 = sbr.rel target = $region3
    $region8: #{tpu_custom_call.1} parent=1 // loop_exit
      _
    %302 = vsyncpa [#allocation3], 1
    %s303 = scalar_lea.sflag [#allocation3], 1
    %304 = vsyncpa %s303, 1
    %305 = vsyncpa [#allocation6], 1
    %306 = vsyncpa [#allocation4], 1
    %s307 = scalar_lea.sflag [#allocation4], 1
    %308 = vsyncpa %s307, 1

</llo_original>
